<compile_context>
chip_gen: v7x
topology: tpu7x:2x2x1
jax: 0.10.0
libtpu: 0.0.40
codegen_flags: <defaults>
</compile_context>

<pallas_src>
import functools

import numpy as np
import jax
import jax.numpy as jnp
from jax.experimental import pallas as pl
from jax.experimental.pallas import tpu as pltpu


def _round_up(x: int, m: int) -> int:
    return (x + m - 1) // m * m


def _time_diff_kernel(t_ref, w_ref, b_ref, o_ref, *, batch_tile: int,
                      resident_t: bool):
    # t_ref: (B_pad, 1) if resident_t else (batch_tile, 1)
    # w_ref, b_ref: (1, D_pad)      o_ref: (batch_tile, D_pad)
    if resident_t:
        start = pl.multiple_of(pl.program_id(0) * batch_tile, batch_tile)
        t = t_ref[pl.ds(start, batch_tile), :]          # (batch_tile, 1)
    else:
        t = t_ref[...]                                   # (batch_tile, 1)
    w = w_ref[...]                                       # (1, D_pad)
    b = b_ref[...]                                       # (1, D_pad)
    # Linear(1 -> D) is a rank-1 broadcast FMA on the VPU (no MXU), then cos.
    y = jnp.cos(t * w + b)                               # f32 compute
    o_ref[...] = y.astype(o_ref.dtype)                   # lane-dense store


def time_difference_encoder(t: jax.Array, weight: jax.Array, bias: jax.Array,
                            *, max_batch_tile: int = 1024,
                            out_dtype=jnp.float32) -> jax.Array:
    """
    t:      (B,)   float -- time differences
    weight: (D, 1) float -- nn.Linear(1, D).weight
    bias:   (D,)   float -- nn.Linear(1, D).bias
    returns (B, D) out_dtype == cos(t[:, None] @ weight.T + bias)
    """
    B = int(t.shape[0])
    D = int(weight.shape[0])
    out_itemsize = jnp.dtype(out_dtype).itemsize

    # Lane-dense output: pad D to a multiple of 128 (padded w/b lanes are zero,
    # the junk cos(0)=1 columns are sliced off below).
    D_pad = _round_up(D, 128)

    # Batch tile: as large as a conservative VMEM budget allows (sized so the
    # double-buffered output + t tiles stay well inside v7x's 64 MiB VMEM).
    tile_budget = 16 * 1024 * 1024
    per_row_bytes = 2 * (D_pad * out_itemsize + 512)      # x2 = double buffer
    bt_cap = max(8, (tile_budget // per_row_bytes) // 8 * 8)
    batch_tile = max(8, (min(max_batch_tile, bt_cap, _round_up(B, 8)) // 8) * 8)
    B_pad = _round_up(B, batch_tile)
    num_tiles = B_pad // batch_tile

    # Fetch t once (constant block index -> resident in VMEM across steps)
    # unless the lane-padded resident copy would get large; then fall back to
    # per-tile blocks (still multi-KB DMAs at these tile sizes).
    resident_t = B_pad <= 8192

    t_col = jnp.pad(t.astype(jnp.float32), (0, B_pad - B)).reshape(B_pad, 1)
    w_row = jnp.pad(weight.reshape(D).astype(jnp.float32),
                    (0, D_pad - D)).reshape(1, D_pad)
    b_row = jnp.pad(bias.reshape(D).astype(jnp.float32),
                    (0, D_pad - D)).reshape(1, D_pad)

    if resident_t:
        t_spec = pl.BlockSpec((B_pad, 1), lambda i: (0, 0))
    else:
        t_spec = pl.BlockSpec((batch_tile, 1), lambda i: (i, 0))

    # Raise the scoped VMEM limit (defaults: 16 MiB v5e / 32 MiB v6e,v7x) so
    # the large double-buffered tiles compile without shrinking, but cap it
    # below v7x's 64 MiB physical VMEM.
    vmem_needed = (2 * batch_tile * (D_pad * out_itemsize + 512)
                   + (2 * B_pad * 512 if resident_t else 0)
                   + 4 * 8 * D_pad * 4)
    vmem_limit = int(min(48 * 2 ** 20,
                         max(32 * 2 ** 20, vmem_needed + (8 << 20))))

    # Note: for very large D (>= 4096) a second "parallel" grid axis over
    # 128-multiple D tiles would keep per-step blocks inside the v7x budget
    # without shrinking batch_tile; not needed at these dimensions.
    out = pl.pallas_call(
        functools.partial(_time_diff_kernel, batch_tile=batch_tile,
                          resident_t=resident_t),
        out_shape=jax.ShapeDtypeStruct((B_pad, D_pad), out_dtype),
        grid_spec=pltpu.PrefetchScalarGridSpec(
            num_scalar_prefetch=0,
            grid=(num_tiles,),
            in_specs=[
                t_spec,                                          # t (once)
                pl.BlockSpec((1, D_pad), lambda i: (0, 0)),      # weight row
                pl.BlockSpec((1, D_pad), lambda i: (0, 0)),      # bias row
            ],
            out_specs=pl.BlockSpec((batch_tile, D_pad), lambda i: (i, 0)),
        ),
        compiler_params=pltpu.CompilerParams(
            dimension_semantics=("parallel",),
            vmem_limit_bytes=vmem_limit),
    )(t_col, w_row, b_row)

    if B_pad != B or D_pad != D:
        out = out[:B, :D]
    return out


def make_params(dimension: int):
    """Deterministic init matching the PyTorch module __init__."""
    w = (1.0 / 10 ** np.linspace(0, 9, dimension)).astype(np.float32).reshape(
        dimension, 1)
    b = np.zeros((dimension,), dtype=np.float32)
    return jnp.asarray(w), jnp.asarray(b)


if __name__ == "__main__":
    batch = 16
    dimension = 32

    key = jax.random.PRNGKey(0)
    t = jax.random.uniform(key, (batch,), dtype=jnp.float32) * 100.0
    weight, bias = make_params(dimension)

    out = jax.block_until_ready(time_difference_encoder(t, weight, bias))
    ref = jnp.cos(t[:, None] @ weight.T + bias[None, :])
    np.testing.assert_allclose(np.asarray(out), np.asarray(ref),
                               rtol=1e-5, atol=2e-5)
    assert out.shape == (batch, dimension)

    # Second config: non-multiple-of-8 batch, multi-step "parallel" grid,
    # exercises batch padding + resident t + lane padding together.
    t2 = jax.random.uniform(jax.random.PRNGKey(1), (1000,),
                            dtype=jnp.float32) * 100.0
    out2 = jax.block_until_ready(
        time_difference_encoder(t2, weight, bias, max_batch_tile=256))
    ref2 = jnp.cos(t2[:, None] @ weight.T + bias[None, :])
    np.testing.assert_allclose(np.asarray(out2), np.asarray(ref2),
                               rtol=1e-5, atol=2e-5)
    assert out2.shape == (1000, dimension)

    print("KERNEL_OK")
</pallas_src>

<mosaic_0001>
module attributes {stable_mosaic.version = 11 : i64} {
  func.func @_time_diff_kernel(%arg0: i32, %arg1: memref<16x1xf32, #tpu.memory_space<vmem>>, %arg2: memref<1x128xf32, #tpu.memory_space<vmem>>, %arg3: memref<1x128xf32, #tpu.memory_space<vmem>>, %arg4: memref<16x128xf32, #tpu.memory_space<vmem>>) attributes {dimension_semantics = [#tpu.dimension_semantics<parallel>], iteration_bounds = array<i64: 1>, scalar_prefetch = 0 : i64, scratch_operands = 0 : i64, tpu.core_type = #tpu.core_type<tc>, window_params = [{pipeline_mode = #tpu.pipeline_mode<synchronous>, transform_indices = @transform_0, window_bounds = array<i64: 16, 1>}, {pipeline_mode = #tpu.pipeline_mode<synchronous>, transform_indices = @transform_1, window_bounds = array<i64: 1, 128>}, {pipeline_mode = #tpu.pipeline_mode<synchronous>, transform_indices = @transform_2, window_bounds = array<i64: 1, 128>}, {transform_indices = @transform_3, window_bounds = array<i64: 16, 128>}]} {
    %c16_i32 = arith.constant 16 : i32
    %0 = arith.muli %arg0, %c16_i32 : i32
    %1 = tpu.assume_multiple %0, 16 : i32
    %2 = arith.index_cast %1 : i32 to index
    %c0 = arith.constant 0 : index
    %3 = vector.load %arg1[%2, %c0] : memref<16x1xf32, #tpu.memory_space<vmem>>, vector<16x1xf32>
    %c0_0 = arith.constant 0 : index
    %c0_1 = arith.constant 0 : index
    %4 = vector.load %arg2[%c0_0, %c0_1] : memref<1x128xf32, #tpu.memory_space<vmem>>, vector<1x128xf32>
    %c0_2 = arith.constant 0 : index
    %c0_3 = arith.constant 0 : index
    %5 = vector.load %arg3[%c0_2, %c0_3] : memref<1x128xf32, #tpu.memory_space<vmem>>, vector<1x128xf32>
    %6 = vector.broadcast %3 : vector<16x1xf32> to vector<16x128xf32>
    %7 = vector.broadcast %4 : vector<1x128xf32> to vector<16x128xf32>
    %8 = arith.mulf %6, %7 : vector<16x128xf32>
    %9 = vector.broadcast %5 : vector<1x128xf32> to vector<16x128xf32>
    %10 = arith.addf %8, %9 : vector<16x128xf32>
    %11 = math.cos %10 : vector<16x128xf32>
    %c0_4 = arith.constant 0 : index
    %c0_5 = arith.constant 0 : index
    %12 = vector.load %arg4[%c0_4, %c0_5] : memref<16x128xf32, #tpu.memory_space<vmem>>, vector<16x128xf32>
    tpu.vector_store %arg4[%c0_4, %c0_5], %11 {strides = array<i32>} : memref<16x128xf32, #tpu.memory_space<vmem>>, vector<16x128xf32>,
    return
  }
  func.func @transform_0(%arg0: i32) -> (i32, i32) {
    %c0_i32 = arith.constant 0 : i32
    %c0_i32_0 = arith.constant 0 : i32
    %c0_i32_1 = arith.constant 0 : i32
    return %c0_i32, %c0_i32_0 : i32, i32
  }
  func.func @transform_1(%arg0: i32) -> (i32, i32) {
    %c0_i32 = arith.constant 0 : i32
    %c0_i32_0 = arith.constant 0 : i32
    %c0_i32_1 = arith.constant 0 : i32
    return %c0_i32, %c0_i32_0 : i32, i32
  }
  func.func @transform_2(%arg0: i32) -> (i32, i32) {
    %c0_i32 = arith.constant 0 : i32
    %c0_i32_0 = arith.constant 0 : i32
    %c0_i32_1 = arith.constant 0 : i32
    return %c0_i32, %c0_i32_0 : i32, i32
  }
  func.func @transform_3(%arg0: i32) -> (i32, i32) {
    %c0_i32 = arith.constant 0 : i32
    %c0_i32_0 = arith.constant 0 : i32
    return %arg0, %c0_i32 : i32, i32
  }
}

</mosaic_0001>

<llo_original>
// kernel: tpu_custom_call.1
$region0: #{tpu_custom_call.1}
  #allocation0 [shape = 'u32[]', space=smem, size = 0x4, offset = 0x4, fixed_abs, tag = 'smem constant byte address 0x4 - core index']
  #allocation1 [shape = 'u32[144,128]{1,0:T(1,128)}', space=vmem, size = 0x12000, scoped, tag = 'internal scratch']
  %s0 = inlined_call_operand.vmem [shape: f32[16,1], index: 0, kind: input, shape index: {}]
  %s1 = inlined_call_operand.vmem [shape: f32[1,128], index: 1, kind: input, shape index: {}]
  %s2 = inlined_call_operand.vmem [shape: f32[1,128], index: 2, kind: input, shape index: {}]
  %s3 = inlined_call_operand.hbm [shape: f32[16,128], index: 3, kind: output, shape index: {}]
  %s4 = sld [smem:[#allocation0]]
  $region22: #{tpu_custom_call.1} parent=0
    _
  %s6 = ssub.s32 1, %s4
  %s7 = scalar_select 0, %s6, %s4
  $region1: #{tpu_custom_call.1} parent=0
    #allocation2 [shape = 'u8[8192]{0}', space=vmem, size = 0x2000, scoped, tag = 'output window, operand 0, single buffered']
    #allocation3 [shape = 's32[1]{0}', space=sflag, size = 0x4, scoped, tag = 'scoped memory for tpu_custom_call.1']
    %8 = vsyncpa [#allocation3], 0
    // Predicated region
    $region2: #{tpu_custom_call.1} parent=1 // pred_check
      _
    $region3: #{tpu_custom_call.1} parent=1 // pred_check_branch
      %10 = sbr.rel (0) target = $region5
    $region4: #{tpu_custom_call.1} parent=1 // pred_region
      _
    $region5: #{tpu_custom_call.1} parent=1 // pred_fallthru
      _
    // Predicated region
    $region6: #{tpu_custom_call.1} parent=1 // pred_check
      _
    $region7: #{tpu_custom_call.1} parent=1 // pred_check_branch
      %12 = sbr.rel (0) target = $region9
    $region8: #{tpu_custom_call.1} parent=1 // pred_region
      _
    $region9: #{tpu_custom_call.1} parent=1 // pred_fallthru
      _
    // Predicated region
    $region10: #{tpu_custom_call.1} parent=1 // pred_check
      _
    $region11: #{tpu_custom_call.1} parent=1 // pred_check_branch
      %14 = sbr.rel (0) target = $region13
    $region12: #{tpu_custom_call.1} parent=1 // pred_region
      _
    $region13: #{tpu_custom_call.1} parent=1 // pred_fallthru
      _
    %s15 = smul.u32 0, 16
    %s16 = scalar_lea.vmem %s0, %s15
    %v17 = vld [vmem:[%s16] sm:$0xff]
    %v18 = vld [vmem:[%s16 + $0x8] sm:$0xff]
    %v19 = vld [vmem:[%s1] sm:$0x1]
    %v20 = vld [vmem:[%s2] sm:$0x1]
    %22 = vset.pattern.permute.xlu0 0
    %23 = vperm.xlu0 %22, %v17
    %v24 = vpop.permute.xlu0 %23
    %27 = vset.pattern.permute.xlu0 0
    %28 = vperm.xlu0 %27, %v18
    %v29 = vpop.permute.xlu0 %28
    %v32 = vlaneseq
    %v33 = vshrl.u32 %v32, 7
    %v34 = vsub.s32 0, %v33
    %v35 = vrot.slane %v19, %v34
    %v37 = vmul.f32 %v24, %v35
    %v38 = vmul.f32 %v29, %v35
    %v40 = vlaneseq
    %v41 = vshrl.u32 %v40, 7
    %v42 = vsub.s32 0, %v41
    %v43 = vrot.slane %v20, %v42
    %v45 = vadd.f32 %v37, %v43
    %v46 = vadd.f32 %v38, %v43
    %v47 = vand.u32 2147483647, %v45
    %vm48 = vcmp.le.f32.partialorder %v47, 0.7853982
    %vm49 = vcmp.lt.s32.totalorder %v45, 0
    %v50 = vand.u32 %v45, 2139095040
    %v51 = vshrl.u32 %v50, 23
    %v52 = vsub.s32 %v51, 127
    %v53 = vand.u32 2147483647, %v45
    %v54 = vand.u32 %v53, 8388607
    %v55 = vor.u32 %v54, 8388608
    %v56 = vsub.s32 0, %v55
    %v57 = vadd.s32 %v52, 1
    %vm58 = vcmp.gt.s32.totalorder %v57, 0
    %v59 = vsel %vm58, %v57, 0
    %v60 = vshrl.u32 %v59, 5
    %v61 = vand.u32 %v59, 31
    %v62 = vsub.s32 32, %v61
    %v63 = vshrl.u32 683565275, %v62
    %v64 = vshll.u32 683565275, %v61
    %v65 = vshrl.u32 2475754826, %v62
    %v66 = vor.u32 %v64, %v65
    %v67 = vshll.u32 2475754826, %v61
    %v68 = vshrl.u32 2131351028, %v62
    %v69 = vor.u32 %v67, %v68
    %v70 = vshll.u32 2131351028, %v61
    %v71 = vshrl.u32 2102212464, %v62
    %v72 = vor.u32 %v70, %v71
    %v73 = vshll.u32 2102212464, %v61
    %v74 = vshrl.u32 920167782, %v62
    %v75 = vor.u32 %v73, %v74
    %v76 = vshll.u32 920167782, %v61
    %v77 = vshrl.u32 1326507024, %v62
    %v78 = vor.u32 %v76, %v77
    %vm79 = vcmp.lt.s32.totalorder %v60, 1
    %vm80 = vcmp.lt.s32.totalorder %v60, 2
    %vm81 = vcmp.lt.s32.totalorder %v60, 3
    %vm82 = vcmp.lt.s32.totalorder %v60, 4
    %v83 = vsel %vm79, %v63, %v66
    %v84 = vsel %vm82, %v72, 2102212464
    %v85 = vsel %vm81, %v69, %v84
    %v86 = vsel %vm80, %v83, %v85
    %v87 = vsel %vm79, %v66, %v69
    %v88 = vsel %vm82, %v75, 920167782
    %v89 = vsel %vm81, %v72, %v88
    %v90 = vsel %vm80, %v87, %v89
    %v91 = vsel %vm79, %v69, %v72
    %v92 = vsel %vm82, %v78, 1326507024
    %v93 = vsel %vm81, %v75, %v92
    %v94 = vsel %vm80, %v91, %v93
    %v95 = vshll.u32 %v55, 8
    %v96 = vmul.u32.u64.compose %v95, %v94
    %v97 = vextract.low.u32 %v96
    %v98 = vextract.high.u32 %v96
    %v99 = vmul.u32.u64.compose %v95, %v90
    %v100 = vextract.low.u32 %v99
    %v101 = vextract.high.u32 %v99
    %v102 = vmul.u32 %v95, %v86
    %v103 = vadd.s32 %v98, %v100
    %vm104 = vc.u32 %v98, %v100
    %v105 = vadd.s32 %v101, 1
    %v106 = vsel %vm104, %v105, %v101
    %v107 = vadd.s32 %v102, %v106
    %v108 = vadd.s32 %v107, 536870912
    %v109 = vshrl.u32 %v108, 30
    %v110 = vshll.u32 %v109, 30
    %v111 = vsub.s32 %v107, %v110
    %vm112 = vcmp.lt.s32.totalorder %v111, 0
    %v113 = vsub.s32 0, %v111
    %v114 = vsel %vm112, %v113, %v111
    %v115 = vclz %v114
    %v116 = vsub.s32 %v115, 2
    %vm117 = vcmp.gt.s32.totalorder 0, %v116
    %v118 = vsel %vm117, 0, %v116
    %v119 = vsub.s32 32, %v118
    %v120 = vshll.u32 %v111, %v118
    %v121 = vshrl.u32 %v103, %v119
    %v122 = vor.u32 %v120, %v121
    %v123 = vsub.s32 4294967266, %v118
    %v124 = vadd.s32 %v123, 127
    %v125 = vshll.u32 %v124, 23
    %v126 = vor.u32 4788187, %v125
    %v127 = vand.u32 2147483647, %v126
    %v129 = vcvt.s32.f32 %v122
    %v130 = vmul.f32 %v129, %v127
    %v131 = vxor.u32 %v130, 2147483648
    %v132 = vsel %vm49, %v131, %v130
    %v133 = vsub.s32 4, %v109
    %v134 = vsel %vm49, %v133, %v109
    %v135 = vsel %vm48, %v45, %v132
    %v136 = vsel %vm48, 0, %v134
    %v137 = vcosq.f32.pop %v135
    %v138 = vsinq.f32.pop %v135
    %vm139 = vweird.f32 %v45
    %v140 = vand.u32 %v136, 3
    %vm141 = vcmp.lt.s32.totalorder %v140, 2
    %vm142 = vcmp.eq.s32.totalorder %v140, 0
    %v143 = vxor.u32 %v138, 2147483648
    %v144 = vsel %vm142, %v137, %v143
    %vm145 = vcmp.eq.s32.totalorder %v140, 2
    %v146 = vxor.u32 %v137, 2147483648
    %v147 = vsel %vm145, %v146, %v138
    %v148 = vsel %vm141, %v144, %v147
    %v149 = vsel %vm139, nan, %v148
    %v150 = vand.u32 2147483647, %v46
    %vm151 = vcmp.le.f32.partialorder %v150, 0.7853982
    %vm152 = vcmp.lt.s32.totalorder %v46, 0
    %v153 = vand.u32 %v46, 2139095040
    %v154 = vshrl.u32 %v153, 23
    %v155 = vsub.s32 %v154, 127
    %v156 = vand.u32 2147483647, %v46
    %v157 = vand.u32 %v156, 8388607
    %v158 = vor.u32 %v157, 8388608
    %v159 = vsub.s32 0, %v158
    %v160 = vadd.s32 %v155, 1
    %vm161 = vcmp.gt.s32.totalorder %v160, 0
    %v162 = vsel %vm161, %v160, 0
    %v163 = vshrl.u32 %v162, 5
    %v164 = vand.u32 %v162, 31
    %v165 = vsub.s32 32, %v164
    %v166 = vshrl.u32 683565275, %v165
    %v167 = vshll.u32 683565275, %v164
    %v168 = vshrl.u32 2475754826, %v165
    %v169 = vor.u32 %v167, %v168
    %v170 = vshll.u32 2475754826, %v164
    %v171 = vshrl.u32 2131351028, %v165
    %v172 = vor.u32 %v170, %v171
    %v173 = vshll.u32 2131351028, %v164
    %v174 = vshrl.u32 2102212464, %v165
    %v175 = vor.u32 %v173, %v174
    %v176 = vshll.u32 2102212464, %v164
    %v177 = vshrl.u32 920167782, %v165
    %v178 = vor.u32 %v176, %v177
    %v179 = vshll.u32 920167782, %v164
    %v180 = vshrl.u32 1326507024, %v165
    %v181 = vor.u32 %v179, %v180
    %vm182 = vcmp.lt.s32.totalorder %v163, 1
    %vm183 = vcmp.lt.s32.totalorder %v163, 2
    %vm184 = vcmp.lt.s32.totalorder %v163, 3
    %vm185 = vcmp.lt.s32.totalorder %v163, 4
    %v186 = vsel %vm182, %v166, %v169
    %v187 = vsel %vm185, %v175, 2102212464
    %v188 = vsel %vm184, %v172, %v187
    %v189 = vsel %vm183, %v186, %v188
    %v190 = vsel %vm182, %v169, %v172
    %v191 = vsel %vm185, %v178, 920167782
    %v192 = vsel %vm184, %v175, %v191
    %v193 = vsel %vm183, %v190, %v192
    %v194 = vsel %vm182, %v172, %v175
    %v195 = vsel %vm185, %v181, 1326507024
    %v196 = vsel %vm184, %v178, %v195
    %v197 = vsel %vm183, %v194, %v196
    %v198 = vshll.u32 %v158, 8
    %v199 = vmul.u32.u64.compose %v198, %v197
    %v200 = vextract.low.u32 %v199
    %v201 = vextract.high.u32 %v199
    %v202 = vmul.u32.u64.compose %v198, %v193
    %v203 = vextract.low.u32 %v202
    %v204 = vextract.high.u32 %v202
    %v205 = vmul.u32 %v198, %v189
    %v206 = vadd.s32 %v201, %v203
    %vm207 = vc.u32 %v201, %v203
    %v208 = vadd.s32 %v204, 1
    %v209 = vsel %vm207, %v208, %v204
    %v210 = vadd.s32 %v205, %v209
    %v211 = vadd.s32 %v210, 536870912
    %v212 = vshrl.u32 %v211, 30
    %v213 = vshll.u32 %v212, 30
    %v214 = vsub.s32 %v210, %v213
    %vm215 = vcmp.lt.s32.totalorder %v214, 0
    %v216 = vsub.s32 0, %v214
    %v217 = vsel %vm215, %v216, %v214
    %v218 = vclz %v217
    %v219 = vsub.s32 %v218, 2
    %vm220 = vcmp.gt.s32.totalorder 0, %v219
    %v221 = vsel %vm220, 0, %v219
    %v222 = vsub.s32 32, %v221
    %v223 = vshll.u32 %v214, %v221
    %v224 = vshrl.u32 %v206, %v222
    %v225 = vor.u32 %v223, %v224
    %v226 = vsub.s32 4294967266, %v221
    %v227 = vadd.s32 %v226, 127
    %v228 = vshll.u32 %v227, 23
    %v229 = vor.u32 4788187, %v228
    %v230 = vand.u32 2147483647, %v229
    %v232 = vcvt.s32.f32 %v225
    %v233 = vmul.f32 %v232, %v230
    %v234 = vxor.u32 %v233, 2147483648
    %v235 = vsel %vm152, %v234, %v233
    %v236 = vsub.s32 4, %v212
    %v237 = vsel %vm152, %v236, %v212
    %v238 = vsel %vm151, %v46, %v235
    %v239 = vsel %vm151, 0, %v237
    %v240 = vcosq.f32.pop %v238
    %v241 = vsinq.f32.pop %v238
    %vm242 = vweird.f32 %v46
    %v243 = vand.u32 %v239, 3
    %vm244 = vcmp.lt.s32.totalorder %v243, 2
    %vm245 = vcmp.eq.s32.totalorder %v243, 0
    %v246 = vxor.u32 %v241, 2147483648
    %v247 = vsel %vm245, %v240, %v246
    %vm248 = vcmp.eq.s32.totalorder %v243, 2
    %v249 = vxor.u32 %v240, 2147483648
    %v250 = vsel %vm248, %v249, %v241
    %v251 = vsel %vm244, %v247, %v250
    %v252 = vsel %vm242, nan, %v251
    %253 = vst [vmem:[#allocation2] sm:$0xff] %v149
    %254 = vst [vmem:[#allocation2 + $0x8] sm:$0xff] %v252
    // Predicated region
    $region14: #{tpu_custom_call.1} parent=1 // pred_check
      _
    $region15: #{tpu_custom_call.1} parent=1 // pred_check_branch
      %256 = sbr.rel (0) target = $region17
    $region16: #{tpu_custom_call.1} parent=1 // pred_region
      %s258 = ssub.s32 256, 256
      %259 = vsyncadd [#allocation3], %s258
      %s260 = sshll.u32 [#allocation2], 4
      %s261 = int_to_ptr.vmem [resolvable:$true] %s260
      %266 = dma.vmem_to_hbm [thread:$0]  %s261, 256, %s3, [#allocation3], 128, 128, 8
    $region17: #{tpu_custom_call.1} parent=1 // pred_fallthru
      _
    // Predicated region
    $region18: #{tpu_custom_call.1} parent=1 // pred_check
      _
    $region19: #{tpu_custom_call.1} parent=1 // pred_check_branch
      %268 = sbr.rel (0) target = $region21
    $region20: #{tpu_custom_call.1} parent=1 // pred_region
      %269 = dma.done [#allocation3], 256
    $region21: #{tpu_custom_call.1} parent=1 // pred_fallthru
      _
    %270 = vsyncpa [#allocation3], 1

</llo_original>
